<compile_context>
chip_gen: v6e
topology: v6e:2x2x1
jax: 0.10.0
libtpu: 0.0.40
codegen_flags: <defaults>
</compile_context>

<pallas_src>
import functools

import jax
import jax.numpy as jnp
from jax.experimental import pallas as pl
from jax.experimental.pallas import tpu as pltpu


def _round_up(x, m):
    return ((x + m - 1) // m) * m


def _pointer_kernel(xdec_ref, enct_ref, w2t_ref, v_ref, mask_ref, out_ref,
                    *, hc, n_chunks, tanh_dtype):
    """One (batch, decoder-tile) grid step.

    xdec_ref : (1, TM, Hp)   decoder states tile                  (matmul dtype)
    enct_ref : (1, Hp, Np)   precomputed x_encoder @ W1^T, transposed (f32)
    w2t_ref  : (Hp, Hp)      W2^T, resident                       (matmul dtype)
    v_ref    : (Hp, 1)       v                                    (f32)
    mask_ref : (1, 1, Np)    int32 mask (nonzero == masked out)
    out_ref  : (1, TM, Np)   log-scores tile                      (f32)
    """
    # Decoder transform on the MXU: (TM, Hp) @ (Hp, Hp), f32 accumulation.
    dec_t = jnp.dot(xdec_ref[0], w2t_ref[...],
                    preferred_element_type=jnp.float32)            # (TM, Hp)

    tm = dec_t.shape[0]
    np_ = out_ref.shape[-1]
    prod = jnp.zeros((tm, np_), jnp.float32)

    # H-chunked additive attention.  Static Python loop == fully unrolled
    # (the review's lax.fori_loop(unroll=True)); chunk starts are static
    # multiples of hc, so every slice is aligned and free.
    for c in range(n_chunks):
        h0 = c * hc
        enc_c = enct_ref[0, h0:h0 + hc, :]                         # (HC, Np) f32
        v_c = v_ref[h0:h0 + hc, :]                                 # (HC, 1)  f32
        dec_c = dec_t[:, h0:h0 + hc]                               # (TM, HC) f32
        # (TM, HC, Np): H on sublanes, N on lanes.
        s = enc_c[None, :, :] + dec_c[:, :, None]
        t = jnp.tanh(s.astype(tanh_dtype)).astype(jnp.float32)
        # v-weighted reduction over H (sublane axis) -> (TM, Np) lane-dense.
        prod = prod + jnp.sum(t * v_c[None, :, :], axis=1)

    # masked_fill(mask, -inf); mask broadcasts over the decoder axis.
    neg_inf = jnp.asarray(-jnp.inf, jnp.float32)
    masked = jnp.where(mask_ref[0] != 0, neg_inf, prod)            # (TM, Np)

    # log_softmax over the encoder axis (fully-masked rows -> NaN, like torch).
    row_max = jnp.max(masked, axis=-1, keepdims=True)
    shifted = masked - row_max
    lse = jnp.log(jnp.sum(jnp.exp(shifted), axis=-1, keepdims=True))
    # TODO(synk): on v7x a bf16 output would halve HBM writeback if the caller
    # tolerates it; kept f32 to match the torch module's output dtype.
    out_ref[0] = (shifted - lse).astype(out_ref.dtype)


def _vmem_limit_bytes():
    cap = 64 << 20                       # conservative fallback (v7x per-core)
    info_fn = getattr(pltpu, "get_tpu_info", None)
    if info_fn is not None:
        try:
            cap = int(info_fn().vmem_capacity_bytes)
        except Exception:
            pass
    # ~75% of physical: ~48 MiB on v7x, ~96 MiB on v5e/v6e.
    return int(min(cap * 3 // 4, 96 << 20))


def _choose_tile_m(Np, Hp, hc, in_bytes, tanh_bytes, vmem_budget):
    """Largest decoder tile (multiple of 8) whose per-step footprint fits.

    Counts the double-buffered x_decoder/out blocks, the resident
    enc^T/W2^T/v/mask blocks, dec_t, the softmax temporaries and the
    (TM, HC, Np) chunk intermediates (s, tanh(s), v-weighted copy).
    """
    fixed = (2 * Hp * Np * 4             # enc^T block (double-buffered)
             + 2 * Hp * Hp * in_bytes    # W2^T block
             + 2 * Hp * 4                # v
             + 2 * 8 * Np * 4            # mask (sublane-padded)
             + (2 << 20))                # compiler-internal scratch headroom
    per_row = (2 * Hp * in_bytes         # x_decoder block
               + 2 * Np * 4              # output block
               + Hp * 4                  # dec_t
               + 4 * Np * 4              # prod / masked / shifted / lse
               + hc * Np * (8 + tanh_bytes))   # chunk temporaries
    avail = max(vmem_budget - fixed, 8 * per_row)
    tm = (avail // per_row // 8) * 8
    return int(max(8, min(tm, 512)))


def pointer_network_forward(x_decoder, x_encoder, mask, w1_t, w2_t, v, *,
                            matmul_dtype=jnp.bfloat16,
                            tanh_dtype=jnp.bfloat16):
    """x_decoder: (B, M, H), x_encoder: (B, N, H), mask: (B, N) bool/int.

    Returns log-scores (B, M, N) in float32.  On v5e pass
    tanh_dtype=jnp.float32 (no bf16 EUP there); pass both dtypes as float32
    for bit-tight numerics.
    """
    B, M, H = x_decoder.shape
    _, N, _ = x_encoder.shape
    f32 = jnp.float32

    # Padded geometry: N lane-dense (multiple of 128); H to a sublane multiple
    # (single chunk) or to a multiple of the 128-row chunk when H > 128.
    Np = _round_up(N, 128)
    if H <= 128:
        Hp = _round_up(H, 8)
        hc, n_chunks = Hp, 1
    else:
        Hp = _round_up(H, 128)
        hc, n_chunks = 128, Hp // 128

    in_bytes = jnp.dtype(matmul_dtype).itemsize
    tanh_bytes = jnp.dtype(tanh_dtype).itemsize
    vmem_limit = _vmem_limit_bytes()
    tm = _choose_tile_m(Np, Hp, hc, in_bytes, tanh_bytes, vmem_limit)
    tm = min(tm, _round_up(M, 8))
    Mp = _round_up(M, tm)
    grid = (B, Mp // tm)

    # Encoder transform once, in plain XLA, already transposed to (B, Hp, Np).
    enc_t = jnp.einsum("bnh,hg->bgn", x_encoder.astype(f32), w1_t.astype(f32))
    enc_t = jnp.pad(enc_t, ((0, 0), (0, Hp - H), (0, Np - N)))

    xdec_p = jnp.pad(x_decoder.astype(f32),
                     ((0, 0), (0, Mp - M), (0, Hp - H))).astype(matmul_dtype)
    w2t_p = jnp.pad(w2_t.astype(f32),
                    ((0, Hp - H), (0, Hp - H))).astype(matmul_dtype)
    v_p = jnp.pad(v.astype(f32), (0, Hp - H)).reshape(Hp, 1)
    # Padded encoder positions are masked (-inf) and sliced off afterwards.
    mask_p = jnp.pad(mask.astype(jnp.int32), ((0, 0), (0, Np - N)),
                     constant_values=1).reshape(B, 1, Np)

    kernel = functools.partial(_pointer_kernel, hc=hc, n_chunks=n_chunks,
                               tanh_dtype=tanh_dtype)

    out = pl.pallas_call(
        kernel,
        out_shape=jax.ShapeDtypeStruct((B, Mp, Np), jnp.float32),
        grid_spec=pltpu.PrefetchScalarGridSpec(
            num_scalar_prefetch=0,
            grid=grid,
            in_specs=[
                pl.BlockSpec((1, tm, Hp), lambda b, mt: (b, mt, 0)),   # x_decoder
                pl.BlockSpec((1, Hp, Np), lambda b, mt: (b, 0, 0)),    # enc^T
                pl.BlockSpec((Hp, Hp), lambda b, mt: (0, 0)),          # W2^T (resident)
                pl.BlockSpec((Hp, 1), lambda b, mt: (0, 0)),           # v    (resident)
                pl.BlockSpec((1, 1, Np), lambda b, mt: (b, 0, 0)),     # mask
            ],
            out_specs=pl.BlockSpec((1, tm, Np), lambda b, mt: (b, mt, 0)),
        ),
        compiler_params=pltpu.CompilerParams(
            dimension_semantics=("parallel", "parallel"),
            vmem_limit_bytes=vmem_limit,
        ),
    )(xdec_p, enc_t, w2t_p, v_p, mask_p)

    return out[:, :M, :N]


class PointerNetwork:
    """JAX/Pallas port of the PyTorch PointerNetwork module.

    Weights are stored transposed relative to torch's nn.Linear layout
    (i.e. (in_features, out_features)); to load torch weights use
    w1_t = w1.weight.T, w2_t = w2.weight.T, v = v.weight[0].
    """

    def __init__(self, n_hidden, key=None):
        self.n_hidden = n_hidden
        if key is None:
            key = jax.random.PRNGKey(0)
        k1, k2, k3 = jax.random.split(key, 3)
        bound = 1.0 / (n_hidden ** 0.5)      # torch nn.Linear default init range
        self.w1_t = jax.random.uniform(k1, (n_hidden, n_hidden), jnp.float32,
                                       -bound, bound)
        self.w2_t = jax.random.uniform(k2, (n_hidden, n_hidden), jnp.float32,
                                       -bound, bound)
        self.v = jax.random.uniform(k3, (n_hidden,), jnp.float32, -bound, bound)

    def __call__(self, x_decoder, x_encoder, mask, eps=1e-16, **kwargs):
        # TODO(synk): `eps` is accepted but unused, matching the original torch
        # forward which never references it.
        del eps
        return pointer_network_forward(x_decoder, x_encoder, mask,
                                       self.w1_t, self.w2_t, self.v, **kwargs)


if __name__ == "__main__":
    # batch=2, decoder len=8, encoder len=16, n_hidden=32
    B, M, N, H = 2, 8, 16, 32
    key = jax.random.PRNGKey(0)
    kd, ke, km, kw = jax.random.split(key, 4)
    x_decoder = jax.random.normal(kd, (B, M, H), dtype=jnp.float32)
    x_encoder = jax.random.normal(ke, (B, N, H), dtype=jnp.float32)
    # boolean mask: True == position masked out; keep >=1 valid slot per row
    mask = jax.random.bernoulli(km, 0.25, (B, N))
    mask = mask.at[:, 0].set(False)

    net = PointerNetwork(H, key=kw)

    # pure-JAX reference of the torch forward (f32)
    enc_r = x_encoder @ net.w1_t                                   # (B, N, H)
    dec_r = x_decoder @ net.w2_t                                   # (B, M, H)
    t_r = jnp.tanh(enc_r[:, None, :, :] + dec_r[:, :, None, :])    # (B, M, N, H)
    prod_r = jnp.einsum("bmnh,h->bmn", t_r, net.v)
    prod_r = jnp.where(mask[:, None, :], -jnp.inf, prod_r)
    ref = jax.nn.log_softmax(prod_r, axis=-1)
    finite = jnp.isfinite(ref)

    # f32 path: bit-tight structural check of the kernel.
    out_f32 = jax.block_until_ready(
        net(x_decoder, x_encoder, mask,
            matmul_dtype=jnp.float32, tanh_dtype=jnp.float32))
    assert out_f32.shape == (B, M, N) and out_f32.dtype == jnp.float32
    assert bool(jnp.all(jnp.isfinite(out_f32) == finite))
    assert bool(jnp.allclose(jnp.where(finite, out_f32, 0.0),
                             jnp.where(finite, ref, 0.0),
                             atol=1e-5, rtol=1e-5))

    # default fast path (bf16 MXU inputs + bf16 tanh, f32 accumulation).
    out_fast = jax.block_until_ready(net(x_decoder, x_encoder, mask))
    assert out_fast.shape == (B, M, N) and out_fast.dtype == jnp.float32
    assert bool(jnp.all(jnp.isfinite(out_fast) == finite))
    assert bool(jnp.allclose(jnp.where(finite, out_fast, 0.0),
                             jnp.where(finite, ref, 0.0),
                             atol=1e-1, rtol=5e-2))

    print("KERNEL_OK")
</pallas_src>

<mosaic_0001>
module attributes {stable_mosaic.version = 11 : i64} {
  func.func @_pointer_kernel(%arg0: i32, %arg1: i32, %arg2: memref<1x8x32xf32, #tpu.memory_space<vmem>>, %arg3: memref<1x32x128xf32, #tpu.memory_space<vmem>>, %arg4: memref<32x32xf32, #tpu.memory_space<vmem>>, %arg5: memref<32x1xf32, #tpu.memory_space<vmem>>, %arg6: memref<1x1x128xi32, #tpu.memory_space<vmem>>, %arg7: memref<1x8x128xf32, #tpu.memory_space<vmem>>) attributes {dimension_semantics = [#tpu.dimension_semantics<parallel>, #tpu.dimension_semantics<parallel>], iteration_bounds = array<i64: 2, 1>, scalar_prefetch = 0 : i64, scratch_operands = 0 : i64, tpu.core_type = #tpu.core_type<tc>, window_params = [{transform_indices = @transform_0, window_bounds = array<i64: 1, 8, 32>}, {transform_indices = @transform_1, window_bounds = array<i64: 1, 32, 128>}, {pipeline_mode = #tpu.pipeline_mode<synchronous>, transform_indices = @transform_2, window_bounds = array<i64: 32, 32>}, {pipeline_mode = #tpu.pipeline_mode<synchronous>, transform_indices = @transform_3, window_bounds = array<i64: 32, 1>}, {transform_indices = @transform_4, window_bounds = array<i64: 1, 1, 128>}, {transform_indices = @transform_5, window_bounds = array<i64: 1, 8, 128>}]} {
    %c0 = arith.constant 0 : index
    %c0_0 = arith.constant 0 : index
    %c0_1 = arith.constant 0 : index
    %0 = vector.load %arg2[%c0, %c0_0, %c0_1] : memref<1x8x32xf32, #tpu.memory_space<vmem>>, vector<1x8x32xf32>
    %1 = vector.shape_cast %0 : vector<1x8x32xf32> to vector<8x32xf32>
    %c0_2 = arith.constant 0 : index
    %c0_3 = arith.constant 0 : index
    %2 = vector.load %arg4[%c0_2, %c0_3] : memref<32x32xf32, #tpu.memory_space<vmem>>, vector<32x32xf32>
    %cst = arith.constant dense<0.000000e+00> : vector<8x32xf32>
    %3 = tpu.matmul %1, %2, %cst {dimension_numbers = #tpu.dot_dimension_numbers<[1], [0], [0], [1], [0, 0, 1, 1], [], []>} : vector<8x32xf32>, vector<32x32xf32>, vector<8x32xf32> -> vector<8x32xf32>
    %cst_4 = arith.constant 0.000000e+00 : f32
    %4 = vector.broadcast %cst_4 : f32 to vector<8x128xf32>
    %c0_5 = arith.constant 0 : index
    %c0_6 = arith.constant 0 : index
    %c0_7 = arith.constant 0 : index
    %5 = vector.load %arg3[%c0_5, %c0_6, %c0_7] : memref<1x32x128xf32, #tpu.memory_space<vmem>>, vector<1x32x128xf32>
    %6 = vector.shape_cast %5 : vector<1x32x128xf32> to vector<32x128xf32>
    %c0_8 = arith.constant 0 : index
    %c0_9 = arith.constant 0 : index
    %7 = vector.load %arg5[%c0_8, %c0_9] : memref<32x1xf32, #tpu.memory_space<vmem>>, vector<32x1xf32>
    %8 = vector.shape_cast %6 : vector<32x128xf32> to vector<1x32x128xf32>
    %9 = vector.shape_cast %3 : vector<8x32xf32> to vector<8x32x1xf32>
    %10 = vector.broadcast %8 : vector<1x32x128xf32> to vector<8x32x128xf32>
    %11 = vector.broadcast %9 : vector<8x32x1xf32> to vector<8x32x128xf32>
    %12 = arith.addf %10, %11 : vector<8x32x128xf32>
    %13 = math.tanh %12 : vector<8x32x128xf32>
    %14 = vector.shape_cast %7 : vector<32x1xf32> to vector<1x32x1xf32>
    %15 = vector.broadcast %14 : vector<1x32x1xf32> to vector<8x32x128xf32>
    %16 = arith.mulf %13, %15 : vector<8x32x128xf32>
    %cst_10 = arith.constant dense<0.000000e+00> : vector<8x128xf32>
    %17 = vector.multi_reduction <add>, %16, %cst_10 [1] : vector<8x32x128xf32> to vector<8x128xf32>
    %18 = arith.addf %4, %17 : vector<8x128xf32>
    %c0_11 = arith.constant 0 : index
    %c0_12 = arith.constant 0 : index
    %c0_13 = arith.constant 0 : index
    %19 = vector.load %arg6[%c0_11, %c0_12, %c0_13] : memref<1x1x128xi32, #tpu.memory_space<vmem>>, vector<1x1x128xi32>
    %20 = vector.shape_cast %19 : vector<1x1x128xi32> to vector<1x128xi32>
    %c0_i32 = arith.constant 0 : i32
    %21 = vector.broadcast %c0_i32 : i32 to vector<1x128xi32>
    %22 = arith.cmpi ne, %20, %21 : vector<1x128xi32>
    %cst_14 = arith.constant 0xFF800000 : f32
    %23 = vector.shape_cast %22 : vector<1x128xi1> to vector<1x128xi1>
    %24 = vector.broadcast %23 : vector<1x128xi1> to vector<8x128xi1>
    %25 = vector.broadcast %cst_14 : f32 to vector<8x128xf32>
    %26 = arith.select %24, %25, %18 : vector<8x128xi1>, vector<8x128xf32>
    %cst_15 = arith.constant dense<0xFF800000> : vector<8xf32>
    %27 = vector.multi_reduction <maximumf>, %26, %cst_15 [1] : vector<8x128xf32> to vector<8xf32>
    %28 = vector.shape_cast %27 : vector<8xf32> to vector<8x1xf32>
    %29 = vector.broadcast %28 : vector<8x1xf32> to vector<8x128xf32>
    %30 = arith.subf %26, %29 : vector<8x128xf32>
    %31 = math.exp %30 : vector<8x128xf32>
    %cst_16 = arith.constant dense<0.000000e+00> : vector<8xf32>
    %32 = vector.multi_reduction <add>, %31, %cst_16 [1] : vector<8x128xf32> to vector<8xf32>
    %33 = vector.shape_cast %32 : vector<8xf32> to vector<8x1xf32>
    %34 = math.log %33 : vector<8x1xf32>
    %35 = vector.broadcast %34 : vector<8x1xf32> to vector<8x128xf32>
    %36 = arith.subf %30, %35 : vector<8x128xf32>
    %c0_17 = arith.constant 0 : index
    %c0_18 = arith.constant 0 : index
    %c0_19 = arith.constant 0 : index
    %37 = vector.load %arg7[%c0_17, %c0_18, %c0_19] : memref<1x8x128xf32, #tpu.memory_space<vmem>>, vector<1x8x128xf32>
    %38 = vector.shape_cast %37 : vector<1x8x128xf32> to vector<8x128xf32>
    %39 = vector.shape_cast %36 : vector<8x128xf32> to vector<1x8x128xf32>
    tpu.vector_store %arg7[%c0_17, %c0_18, %c0_19], %39 {strides = array<i32>} : memref<1x8x128xf32, #tpu.memory_space<vmem>>, vector<1x8x128xf32>,
    return
  }
  func.func @transform_0(%arg0: i32, %arg1: i32) -> (i32, i32, i32) {
    %c0_i32 = arith.constant 0 : i32
    %c0_i32_0 = arith.constant 0 : i32
    return %arg0, %arg1, %c0_i32 : i32, i32, i32
  }
  func.func @transform_1(%arg0: i32, %arg1: i32) -> (i32, i32, i32) {
    %c0_i32 = arith.constant 0 : i32
    %c0_i32_0 = arith.constant 0 : i32
    %c0_i32_1 = arith.constant 0 : i32
    return %arg0, %c0_i32, %c0_i32_0 : i32, i32, i32
  }
  func.func @transform_2(%arg0: i32, %arg1: i32) -> (i32, i32) {
    %c0_i32 = arith.constant 0 : i32
    %c0_i32_0 = arith.constant 0 : i32
    %c0_i32_1 = arith.constant 0 : i32
    return %c0_i32, %c0_i32_0 : i32, i32
  }
  func.func @transform_3(%arg0: i32, %arg1: i32) -> (i32, i32) {
    %c0_i32 = arith.constant 0 : i32
    %c0_i32_0 = arith.constant 0 : i32
    %c0_i32_1 = arith.constant 0 : i32
    return %c0_i32, %c0_i32_0 : i32, i32
  }
  func.func @transform_4(%arg0: i32, %arg1: i32) -> (i32, i32, i32) {
    %c0_i32 = arith.constant 0 : i32
    %c0_i32_0 = arith.constant 0 : i32
    %c0_i32_1 = arith.constant 0 : i32
    return %arg0, %c0_i32, %c0_i32_0 : i32, i32, i32
  }
  func.func @transform_5(%arg0: i32, %arg1: i32) -> (i32, i32, i32) {
    %c0_i32 = arith.constant 0 : i32
    %c0_i32_0 = arith.constant 0 : i32
    return %arg0, %arg1, %c0_i32 : i32, i32, i32
  }
}

</mosaic_0001>

<llo_original>
// kernel: tpu_custom_call.1
$region0: #{tpu_custom_call.1}
  #allocation0 [shape = 'u32[]', space=smem, size = 0x4, offset = 0x4, fixed_abs, tag = 'smem constant byte address 0x4 - core index']
  #allocation1 [shape = 'u32[144,128]{1,0:T(1,128)}', space=vmem, size = 0x12000, scoped, tag = 'internal scratch']
  %s0 = inlined_call_operand.hbm [shape: f32[2,8,32], index: 0, kind: input, shape index: {}]
  %s1 = inlined_call_operand.hbm [shape: f32[2,32,128], index: 1, kind: input, shape index: {}]
  %s2 = inlined_call_operand.vmem [shape: f32[32,32], index: 2, kind: input, shape index: {}]
  %s3 = inlined_call_operand.vmem [shape: f32[32,1], index: 3, kind: input, shape index: {}]
  %s4 = inlined_call_operand.vmem [shape: s32[2,1,128], index: 4, kind: input, shape index: {}]
  %s5 = inlined_call_operand.hbm [shape: f32[2,8,128], index: 5, kind: output, shape index: {}]
  %s6 = sld [smem:[#allocation0]]
  $region61: #{tpu_custom_call.1} parent=0
    _
  %s8 = ssub.s32 1, %s6
  %s9 = scalar_select 0, %s8, %s6
  $region1: #{tpu_custom_call.1} parent=0
    #allocation2 [shape = 'u8[8192]{0}', space=vmem, size = 0x2000, scoped, tag = 'input window, operand 0']
    #allocation3 [shape = 's32[2]{0}', space=sflag, size = 0x8, scoped, tag = 'scoped memory for tpu_custom_call.1']
    #allocation4 [shape = 's32[2]{0}', space=sflag, size = 0x8, scoped, tag = 'scoped memory for tpu_custom_call.1']
    #allocation5 [shape = 'u8[32768]{0}', space=vmem, size = 0x8000, scoped, tag = 'input window, operand 1']
    #allocation6 [shape = 's32[2]{0}', space=sflag, size = 0x8, scoped, tag = 'scoped memory for tpu_custom_call.1']
    #allocation7 [shape = 'u8[8192]{0}', space=vmem, size = 0x2000, scoped, tag = 'output window, operand 0']
    %10 = vsyncpa [#allocation3], 0
    %s11 = scalar_lea.sflag [#allocation3], 1
    %12 = vsyncpa %s11, 0
    %13 = vsyncpa [#allocation6], 0
    %s14 = scalar_lea.sflag [#allocation6], 1
    %15 = vsyncpa %s14, 0
    %16 = vsyncpa [#allocation4], 0
    %s17 = scalar_lea.sflag [#allocation4], 1
    %18 = vsyncpa %s17, 0
    loop: start=0, step=1, limit=4
    $region2: #{tpu_custom_call.1} parent=1 // loop_pre_header
      _
    $region3: #{tpu_custom_call.1} parent=1 // loop_header
      %s20 = sphi 0, %s24
      %p21 = scmp.ge.s32.totalorder %s20, 4
      %s27 = sphi 0, %s39
      %s28 = sphi 0, %s35
      %s29 = sphi 0, %s27
      %s30 = sphi 0, %s28
      %s31 = sphi 0, %s29
      %s32 = sphi 0, %s30
      %s44 = sphi 0, %s46
      %s47 = sphi 0, %s44
      %s48 = sphi 0, %s47
      %s64 = sphi 0, %s48
      %s70 = sphi 0, %s72
      %s73 = sphi 0, %s70
      %s74 = sphi 0, %s73
      %s90 = sphi 0, %s74
      %s94 = sphi 0, %s94
      %s96 = sphi 0, %s94
      %s97 = sphi 0, %s96
      %s111 = sphi 0, %s97
      %s115 = sphi 0, %s115
      %s117 = sphi 0, %s115
      %s118 = sphi 0, %s117
      %s132 = sphi 0, %s118
      %s138 = sphi 0, %s140
      %s141 = sphi 0, %s138
      %s142 = sphi 0, %s141
      %s158 = sphi 0, %s142
      %s166 = sphi 0, %s168
      %s169 = sphi 0, %s166
      %s170 = sphi 0, %s169
      %s186 = sphi 0, %s170
    $region4: #{tpu_custom_call.1} parent=1 // loop_header_branch
      %23 = sbr.rel (%p21) target = $region8
    $region5: #{tpu_custom_call.1} parent=1 // loop_body
      %s25 = ssub.s32 %s20, 1
      %s26 = ssub.s32 %s20, 2
      %s33 = sadd.s32 1, %s28
      %p34 = scmp.ge.s32.totalorder %s33, 1
      %s35 = scalar_select %p34, 0, %s33
      %s36 = sadd.s32 1, %s27
      %s37 = scalar_select %p34, %s36, %s27
      %p38 = scmp.ge.s32.totalorder %s37, 2
      %s39 = scalar_select %p38, 0, %s37
      %s40 = ssub.s32 %s27, %s39
      %s41 = ssub.s32 %s28, %s35
      %s42 = sor.u32 %s40, %s41
      %p43 = scmp.eq.s32.totalorder %s42, 0
      %s45 = sadd.s32 %s44, 1
      %s46 = scalar_select %p43, %s44, %s45
      %p49 = pneg %p43
      %p50 = scmp.eq.s32.totalorder %s20, 1
      %p51 = por %p49, %p50
      %p52 = scmp.ne.s32.totalorder %s44, %s47
      %p53 = scmp.eq.s32.totalorder %s20, 0
      %p54 = por %p52, %p53
      %p55 = scmp.ne.s32.totalorder %s44, %s47
      %p56 = scmp.eq.s32.totalorder %s25, 1
      %p57 = por %p55, %p56
      %p58 = scmp.ne.s32.totalorder %s47, %s48
      %p59 = scmp.eq.s32.totalorder %s25, 0
      %p60 = por %p58, %p59
      %p61 = scmp.ne.s32.totalorder %s47, %s48
      %p62 = scmp.eq.s32.totalorder %s26, 1
      %p63 = por %p61, %p62
      %p65 = scmp.ne.s32.totalorder %s48, %s64
      %p66 = scmp.eq.s32.totalorder %s26, 0
      %p67 = por %p65, %p66
      %s68 = ssub.s32 %s27, %s39
      %p69 = scmp.eq.s32.totalorder %s68, 0
      %s71 = sadd.s32 %s70, 1
      %s72 = scalar_select %p69, %s70, %s71
      %p75 = pneg %p69
      %p76 = scmp.eq.s32.totalorder %s20, 1
      %p77 = por %p75, %p76
      %p78 = scmp.ne.s32.totalorder %s70, %s73
      %p79 = scmp.eq.s32.totalorder %s20, 0
      %p80 = por %p78, %p79
      %p81 = scmp.ne.s32.totalorder %s70, %s73
      %p82 = scmp.eq.s32.totalorder %s25, 1
      %p83 = por %p81, %p82
      %p84 = scmp.ne.s32.totalorder %s73, %s74
      %p85 = scmp.eq.s32.totalorder %s25, 0
      %p86 = por %p84, %p85
      %p87 = scmp.ne.s32.totalorder %s73, %s74
      %p88 = scmp.eq.s32.totalorder %s26, 1
      %p89 = por %p87, %p88
      %p91 = scmp.ne.s32.totalorder %s74, %s90
      %p92 = scmp.eq.s32.totalorder %s26, 0
      %p93 = por %p91, %p92
      %s95 = sadd.s32 %s94, 1
      %p98 = scmp.eq.s32.totalorder %s20, 1
      %p99 = scmp.ne.s32.totalorder %s94, %s96
      %p100 = scmp.eq.s32.totalorder %s20, 0
      %p101 = por %p99, %p100
      %p102 = scmp.ne.s32.totalorder %s94, %s96
      %p103 = scmp.eq.s32.totalorder %s25, 1
      %p104 = por %p102, %p103
      %p105 = scmp.ne.s32.totalorder %s96, %s97
      %p106 = scmp.eq.s32.totalorder %s25, 0
      %p107 = por %p105, %p106
      %p108 = scmp.ne.s32.totalorder %s96, %s97
      %p109 = scmp.eq.s32.totalorder %s26, 1
      %p110 = por %p108, %p109
      %p112 = scmp.ne.s32.totalorder %s97, %s111
      %p113 = scmp.eq.s32.totalorder %s26, 0
      %p114 = por %p112, %p113
      %s116 = sadd.s32 %s115, 1
      %p119 = scmp.eq.s32.totalorder %s20, 1
      %p120 = scmp.ne.s32.totalorder %s115, %s117
      %p121 = scmp.eq.s32.totalorder %s20, 0
      %p122 = por %p120, %p121
      %p123 = scmp.ne.s32.totalorder %s115, %s117
      %p124 = scmp.eq.s32.totalorder %s25, 1
      %p125 = por %p123, %p124
      %p126 = scmp.ne.s32.totalorder %s117, %s118
      %p127 = scmp.eq.s32.totalorder %s25, 0
      %p128 = por %p126, %p127
      %p129 = scmp.ne.s32.totalorder %s117, %s118
      %p130 = scmp.eq.s32.totalorder %s26, 1
      %p131 = por %p129, %p130
      %p133 = scmp.ne.s32.totalorder %s118, %s132
      %p134 = scmp.eq.s32.totalorder %s26, 0
      %p135 = por %p133, %p134
      %s136 = ssub.s32 %s27, %s39
      %p137 = scmp.eq.s32.totalorder %s136, 0
      %s139 = sadd.s32 %s138, 1
      %s140 = scalar_select %p137, %s138, %s139
      %p143 = pneg %p137
      %p144 = scmp.eq.s32.totalorder %s20, 1
      %p145 = por %p143, %p144
      %p146 = scmp.ne.s32.totalorder %s138, %s141
      %p147 = scmp.eq.s32.totalorder %s20, 0
      %p148 = por %p146, %p147
      %p149 = scmp.ne.s32.totalorder %s138, %s141
      %p150 = scmp.eq.s32.totalorder %s25, 1
      %p151 = por %p149, %p150
      %p152 = scmp.ne.s32.totalorder %s141, %s142
      %p153 = scmp.eq.s32.totalorder %s25, 0
      %p154 = por %p152, %p153
      %p155 = scmp.ne.s32.totalorder %s141, %s142
      %p156 = scmp.eq.s32.totalorder %s26, 1
      %p157 = por %p155, %p156
      %p159 = scmp.ne.s32.totalorder %s142, %s158
      %p160 = scmp.eq.s32.totalorder %s26, 0
      %p161 = por %p159, %p160
      %s162 = ssub.s32 %s27, %s39
      %s163 = ssub.s32 %s28, %s35
      %s164 = sor.u32 %s162, %s163
      %p165 = scmp.eq.s32.totalorder %s164, 0
      %s167 = sadd.s32 %s166, 1
      %s168 = scalar_select %p165, %s166, %s167
      %p171 = pneg %p165
      %p172 = scmp.eq.s32.totalorder %s20, 1
      %p173 = por %p171, %p172
      %p174 = scmp.ne.s32.totalorder %s166, %s169
      %p175 = scmp.eq.s32.totalorder %s20, 0
      %p176 = por %p174, %p175
      %p177 = scmp.ne.s32.totalorder %s166, %s169
      %p178 = scmp.eq.s32.totalorder %s25, 1
      %p179 = por %p177, %p178
      %p180 = scmp.ne.s32.totalorder %s169, %s170
      %p181 = scmp.eq.s32.totalorder %s25, 0
      %p182 = por %p180, %p181
      %p183 = scmp.ne.s32.totalorder %s169, %s170
      %p184 = scmp.eq.s32.totalorder %s26, 1
      %p185 = por %p183, %p184
      %p187 = scmp.ne.s32.totalorder %s170, %s186
      %p188 = scmp.eq.s32.totalorder %s26, 0
      %p189 = por %p187, %p188
      %p190 = scmp.le.s32.totalorder 1, %s20
      %p191 = scmp.lt.s32.totalorder %s20, 3
      %p192 = pnand %p190, %p191
      %p193 = pneg %p192
      // Predicated region
      $region9: #{tpu_custom_call.1} parent=5 // pred_check
        _
      $region10: #{tpu_custom_call.1} parent=5 // pred_check_branch
        %195 = sbr.rel (%p192) target = $region12
      $region11: #{tpu_custom_call.1} parent=5 // pred_region
        %s196 = ssub.s32 %s20, 1
        // Predicated region
        $region13: #{tpu_custom_call.1} parent=11 // pred_check
          %p197 = pneg %p107
        $region14: #{tpu_custom_call.1} parent=11 // pred_check_branch
          %199 = sbr.rel (%p197) target = $region16
        $region15: #{tpu_custom_call.1} parent=11 // pred_region
          _
        $region16: #{tpu_custom_call.1} parent=11 // pred_fallthru
          _
        // Predicated region
        $region17: #{tpu_custom_call.1} parent=11 // pred_check
          %p200 = pneg %p128
        $region18: #{tpu_custom_call.1} parent=11 // pred_check_branch
          %202 = sbr.rel (%p200) target = $region20
        $region19: #{tpu_custom_call.1} parent=11 // pred_region
          _
        $region20: #{tpu_custom_call.1} parent=11 // pred_fallthru
          _
      $region12: #{tpu_custom_call.1} parent=5 // pred_fallthru
        _
      %p203 = scmp.lt.s32.totalorder %s20, 2
      // Predicated region
      $region21: #{tpu_custom_call.1} parent=5 // pred_check
        %p204 = pneg %p203
      $region22: #{tpu_custom_call.1} parent=5 // pred_check_branch
        %206 = sbr.rel (%p204) target = $region24
      $region23: #{tpu_custom_call.1} parent=5 // pred_region
        // Predicated region
        $region25: #{tpu_custom_call.1} parent=23 // pred_check
          %p207 = pneg %p54
        $region26: #{tpu_custom_call.1} parent=23 // pred_check_branch
          %209 = sbr.rel (%p207) target = $region28
        $region27: #{tpu_custom_call.1} parent=23 // pred_region
          %s210 = sand.u32 %s44, 1
          %s211 = scalar_lea.sflag [#allocation3], %s210
          %s212 = sand.u32 %s44, 1
          %s213 = smul.addr %s212, 8
          %s214 = scalar_lea.vmem [#allocation2], %s213
          %s216 = ssub.s32 128, 128
          %217 = vsyncadd %s211, %s216
          %s218 = sadd.s32 %s28, %s27
          %s219 = smul.addr %s218, 128
          %s220 = scalar_lea.hbm %s0, %s219
          %s222 = sshll.u32 %s214, 4
          %s223 = int_to_ptr.vmem [resolvable:$true] %s222
          %225 = dma.hbm_to_vmem [thread:$0]  %s220, 128, %s223, %s211
        $region28: #{tpu_custom_call.1} parent=23 // pred_fallthru
          _
        // Predicated region
        $region29: #{tpu_custom_call.1} parent=23 // pred_check
          %p226 = pneg %p80
        $region30: #{tpu_custom_call.1} parent=23 // pred_check_branch
          %228 = sbr.rel (%p226) target = $region32
        $region31: #{tpu_custom_call.1} parent=23 // pred_region
          %s229 = sand.u32 %s70, 1
          %s230 = scalar_lea.sflag [#allocation6], %s229
          %s231 = sand.u32 %s70, 1
          %s232 = smul.addr %s231, 32
          %s233 = scalar_lea.vmem [#allocation5], %s232
          %s235 = ssub.s32 512, 512
          %236 = vsyncadd %s230, %s235
          %s237 = smul.addr %s27, 4
          %s238 = smul.addr %s237, 128
          %s239 = scalar_lea.hbm %s1, %s238
          %s240 = sshll.u32 %s233, 4
          %s241 = int_to_ptr.vmem [resolvable:$true] %s240
          %246 = dma.hbm_to_vmem [thread:$0]  %s239, 512, %s241, %s230, 128, 128, 8
        $region32: #{tpu_custom_call.1} parent=23 // pred_fallthru
          _
        // Predicated region
        $region33: #{tpu_custom_call.1} parent=23 // pred_check
          %p247 = pneg %p148
        $region34: #{tpu_custom_call.1} parent=23 // pred_check_branch
          %249 = sbr.rel (%p247) target = $region36
        $region35: #{tpu_custom_call.1} parent=23 // pred_region
          %p250 = scmp.lt.s32.totalorder %s27, 1
          %s251 = scalar_select %p250, %s27, 1
          %s252 = scalar_lea.vmem %s4, %s251
        $region36: #{tpu_custom_call.1} parent=23 // pred_fallthru
          _
      $region24: #{tpu_custom_call.1} parent=5 // pred_fallthru
        _
      %p253 = scmp.le.s32.totalorder 1, %s20
      %p254 = scmp.lt.s32.totalorder %s20, 3
      %p255 = pnand %p253, %p254
      %p256 = pneg %p255
      // Predicated region
      $region37: #{tpu_custom_call.1} parent=5 // pred_check
        _
      $region38: #{tpu_custom_call.1} parent=5 // pred_check_branch
        %258 = sbr.rel (%p255) target = $region40
      $region39: #{tpu_custom_call.1} parent=5 // pred_region
        %s259 = ssub.s32 %s20, 1
        %s260 = sand.u32 %s47, 1
        %s261 = scalar_lea.sflag [#allocation3], %s260
        %s262 = sand.u32 %s47, 1
        %s263 = smul.addr %s262, 8
        %s264 = scalar_lea.vmem [#allocation2], %s263
        // Predicated region
        $region41: #{tpu_custom_call.1} parent=39 // pred_check
          %p265 = pneg %p60
        $region42: #{tpu_custom_call.1} parent=39 // pred_check_branch
          %267 = sbr.rel (%p265) target = $region44
        $region43: #{tpu_custom_call.1} parent=39 // pred_region
          %268 = dma.done %s261, 128
        $region44: #{tpu_custom_call.1} parent=39 // pred_fallthru
          _
        %s269 = sand.u32 %s73, 1
        %s270 = scalar_lea.sflag [#allocation6], %s269
        %s271 = sand.u32 %s73, 1
        %s272 = smul.addr %s271, 32
        %s273 = scalar_lea.vmem [#allocation5], %s272
        // Predicated region
        $region45: #{tpu_custom_call.1} parent=39 // pred_check
          %p274 = pneg %p86
        $region46: #{tpu_custom_call.1} parent=39 // pred_check_branch
          %276 = sbr.rel (%p274) target = $region48
        $region47: #{tpu_custom_call.1} parent=39 // pred_region
          %277 = dma.done %s270, 512
        $region48: #{tpu_custom_call.1} parent=39 // pred_fallthru
          _
        %s278 = sand.u32 %s47, 1
        %s279 = scalar_lea.sflag [#allocation3], %s278
        %s280 = sand.u32 %s47, 1
        %s281 = smul.addr %s280, 8
        %s282 = scalar_lea.vmem [#allocation2], %s281
        %p283 = pneg %p60
        %p284 = pneg %p57
        %s285 = sand.u32 %s73, 1
        %s286 = scalar_lea.sflag [#allocation6], %s285
        %s287 = sand.u32 %s73, 1
        %s288 = smul.addr %s287, 32
        %s289 = scalar_lea.vmem [#allocation5], %s288
        %p290 = pneg %p86
        %p291 = pneg %p83
        %p292 = pneg %p107
        %p293 = pneg %p104
        %p294 = pneg %p128
        %p295 = pneg %p125
        %p296 = scmp.lt.s32.totalorder %s29, 1
        %s297 = scalar_select %p296, %s29, 1
        %s298 = scalar_lea.vmem %s4, %s297
        %p299 = pneg %p154
        %p300 = pneg %p151
        %p301 = pneg %p182
        %p302 = pneg %p179
        %s303 = sand.u32 %s169, 1
        %s304 = scalar_lea.sflag [#allocation4], %s303
        %s305 = sand.u32 %s169, 1
        %s306 = smul.addr %s305, 8
        %s307 = scalar_lea.vmem [#allocation7], %s306
        %p308 = scmp.lt.s32.totalorder %s29, 1
        %s309 = scalar_select %p308, %s29, 1
        %s310 = scalar_lea.vmem %s4, %s309
        %v311 = vld [vmem:[%s264] sm:$0xff]
        %v312 = vld [vmem:[%s2] sm:$0xff]
        %v313 = vld [vmem:[%s2 + $0x8] sm:$0xff]
        %v314 = vld [vmem:[%s2 + $0x10] sm:$0xff]
        %v315 = vld [vmem:[%s2 + $0x18] sm:$0xff]
        %vm316 = vcmask 261120
        %v318 = vsel %vm316, %v311, 0
        %320 = vmatprep.subr.mxu0 0.0
        %321 = vmatpush1.msra.mxu0 0.0
        %322 = vmatprep.subr.mxu0 0.0
        %323 = vmatpush1.msra.mxu0 0.0
        %324 = vmatprep.subr.mxu0 0.0
        %325 = vmatpush1.msra.mxu0 0.0
        %326 = vmatprep.subr.mxu0 0.0
        %327 = vmatpush1.msra.mxu0 0.0
        %328 = vmatprep.subr.mxu0 0.0
        %329 = vmatpush1.msra.mxu0 0.0
        %330 = vmatprep.subr.mxu0 0.0
        %331 = vmatpush1.msra.mxu0 0.0
        %332 = vmatprep.subr.mxu0 0.0
        %333 = vmatpush1.msra.mxu0 0.0
        %334 = vmatprep.subr.mxu0 0.0
        %335 = vmatpush1.msra.mxu0 0.0
        %336 = vmatprep.subr.mxu0 0.0
        %337 = vmatpush1.msra.mxu0 0.0
        %338 = vmatprep.subr.mxu0 0.0
        %339 = vmatpush1.msra.mxu0 0.0
        %340 = vmatprep.subr.mxu0 0.0
        %341 = vmatpush1.msra.mxu0 0.0
        %342 = vmatprep.subr.mxu0 0.0
        %343 = vmatpush1.msra.mxu0 0.0
        %344 = vmatprep.subr.mxu0 0.0
        %345 = vmatpush1.msra.mxu0 %v315
        %346 = vmatprep.subr.mxu0 0.0
        %347 = vmatpush1.msra.mxu0 %v314
        %348 = vmatprep.subr.mxu0 0.0
        %349 = vmatpush1.msra.mxu0 %v313
        %350 = vmatprep.subr.mxu0 0.0
        %351 = vmatpush1.msra.mxu0 %v312
        %352 = vmatprep.subr.mxu0 0.0
        %353 = vmatpush2.msra.mxu0 0.0
        %354 = vmatprep.subr.mxu0 0.0
        %355 = vmatpush2.msra.mxu0 0.0
        %356 = vmatprep.subr.mxu0 0.0
        %357 = vmatpush2.msra.mxu0 0.0
        %358 = vmatprep.subr.mxu0 0.0
        %359 = vmatpush2.msra.mxu0 0.0
        %360 = vmatprep.subr.mxu0 0.0
        %361 = vmatpush2.msra.mxu0 0.0
        %362 = vmatprep.subr.mxu0 0.0
        %363 = vmatpush2.msra.mxu0 0.0
        %364 = vmatprep.subr.mxu0 0.0
        %365 = vmatpush2.msra.mxu0 0.0
        %366 = vmatprep.subr.mxu0 0.0
        %367 = vmatpush2.msra.mxu0 0.0
        %368 = vmatprep.subr.mxu0 0.0
        %369 = vmatpush2.msra.mxu0 0.0
        %370 = vmatprep.subr.mxu0 0.0
        %371 = vmatpush2.msra.mxu0 0.0
        %372 = vmatprep.subr.mxu0 0.0
        %373 = vmatpush2.msra.mxu0 0.0
        %374 = vmatprep.subr.mxu0 0.0
        %375 = vmatpush2.msra.mxu0 0.0
        %376 = vmatprep.subr.mxu0 0.0
        %377 = vmatpush2.msra.mxu0 0.0
        %378 = vmatprep.subr.mxu0 0.0
        %379 = vmatpush2.msra.mxu0 0.0
        %380 = vmatprep.subr.mxu0 0.0
        %381 = vmatpush2.msra.mxu0 0.0
        %382 = vmatprep.subr.mxu0 0.0
        %383 = vmatpush2.msra.mxu0 0.0
        %384 = vmatprep.mubr.f32.mxu0 0.0
        %385 = vmatmul.mubr.f32.gmra.mxu0 %v318
        %v386 = vpop.f32.mrf.mxu0
        %v387 = vadd.f32 0.0, %v386
        %v388 = vpop.f32.mrf.mxu0
        %389 = vdwg.mxu0
        %v390 = vld [vmem:[%s273] sm:$0xff]
        %v391 = vld [vmem:[%s273 + $0x8] sm:$0xff]
        %v392 = vld [vmem:[%s273 + $0x10] sm:$0xff]
        %v393 = vld [vmem:[%s273 + $0x18] sm:$0xff]
        %v394 = vld [vmem:[%s3] sm:$0xff]
        %v395 = vld [vmem:[%s3 + $0x8] sm:$0xff]
        %v396 = vld [vmem:[%s3 + $0x10] sm:$0xff]
        %v397 = vld [vmem:[%s3 + $0x18] sm:$0xff]
        %v398 = vlaneseq
        %v399 = vshrl.u32 %v398, 7
        %v400 = vsub.s32 0, %v399
        %v401 = vrot.slane %v387, %v400
        %403 = vbcast.lane.b32.xlu0 %v401, 256
        %v404 = vpop.permute.xlu0 %403
        %s406 = sor.u32 256, 8
        %407 = vbcast.lane.b32.xlu0 %v401, %s406
        %v408 = vpop.permute.xlu0 %407
        %s410 = sor.u32 256, 16
        %411 = vbcast.lane.b32.xlu0 %v401, %s410
        %v412 = vpop.permute.xlu0 %411
        %s414 = sor.u32 256, 24
        %415 = vbcast.lane.b32.xlu0 %v401, %s414
        %v416 = vpop.permute.xlu0 %415
        %v417 = vlaneseq
        %v418 = vshrl.u32 %v417, 7
        %v419 = vsub.s32 1, %v418
        %v420 = vrot.slane %v387, %v419
        %422 = vbcast.lane.b32.xlu0 %v420, 256
        %v423 = vpop.permute.xlu0 %422
        %s425 = sor.u32 256, 8
        %426 = vbcast.lane.b32.xlu0 %v420, %s425
        %v427 = vpop.permute.xlu0 %426
        %s429 = sor.u32 256, 16
        %430 = vbcast.lane.b32.xlu0 %v420, %s429
        %v431 = vpop.permute.xlu0 %430
        %s433 = sor.u32 256, 24
        %434 = vbcast.lane.b32.xlu0 %v420, %s433
        %v435 = vpop.permute.xlu0 %434
        %v436 = vlaneseq
        %v437 = vshrl.u32 %v436, 7
        %v438 = vsub.s32 2, %v437
        %v439 = vrot.slane %v387, %v438
        %441 = vbcast.lane.b32.xlu0 %v439, 256
        %v442 = vpop.permute.xlu0 %441
        %s444 = sor.u32 256, 8
        %445 = vbcast.lane.b32.xlu0 %v439, %s444
        %v446 = vpop.permute.xlu0 %445
        %s448 = sor.u32 256, 16
        %449 = vbcast.lane.b32.xlu0 %v439, %s448
        %v450 = vpop.permute.xlu0 %449
        %s452 = sor.u32 256, 24
        %453 = vbcast.lane.b32.xlu0 %v439, %s452
        %v454 = vpop.permute.xlu0 %453
        %v455 = vlaneseq
        %v456 = vshrl.u32 %v455, 7
        %v457 = vsub.s32 3, %v456
        %v458 = vrot.slane %v387, %v457
        %460 = vbcast.lane.b32.xlu0 %v458, 256
        %v461 = vpop.permute.xlu0 %460
        %s463 = sor.u32 256, 8
        %464 = vbcast.lane.b32.xlu0 %v458, %s463
        %v465 = vpop.permute.xlu0 %464
        %s467 = sor.u32 256, 16
        %468 = vbcast.lane.b32.xlu0 %v458, %s467
        %v469 = vpop.permute.xlu0 %468
        %s471 = sor.u32 256, 24
        %472 = vbcast.lane.b32.xlu0 %v458, %s471
        %v473 = vpop.permute.xlu0 %472
        %v474 = vlaneseq
        %v475 = vshrl.u32 %v474, 7
        %v476 = vsub.s32 4, %v475
        %v477 = vrot.slane %v387, %v476
        %479 = vbcast.lane.b32.xlu0 %v477, 256
        %v480 = vpop.permute.xlu0 %479
        %s482 = sor.u32 256, 8
        %483 = vbcast.lane.b32.xlu0 %v477, %s482
        %v484 = vpop.permute.xlu0 %483
        %s486 = sor.u32 256, 16
        %487 = vbcast.lane.b32.xlu0 %v477, %s486
        %v488 = vpop.permute.xlu0 %487
        %s490 = sor.u32 256, 24
        %491 = vbcast.lane.b32.xlu0 %v477, %s490
        %v492 = vpop.permute.xlu0 %491
        %v493 = vlaneseq
        %v494 = vshrl.u32 %v493, 7
        %v495 = vsub.s32 5, %v494
        %v496 = vrot.slane %v387, %v495
        %498 = vbcast.lane.b32.xlu0 %v496, 256
        %v499 = vpop.permute.xlu0 %498
        %s501 = sor.u32 256, 8
        %502 = vbcast.lane.b32.xlu0 %v496, %s501
        %v503 = vpop.permute.xlu0 %502
        %s505 = sor.u32 256, 16
        %506 = vbcast.lane.b32.xlu0 %v496, %s505
        %v507 = vpop.permute.xlu0 %506
        %s509 = sor.u32 256, 24
        %510 = vbcast.lane.b32.xlu0 %v496, %s509
        %v511 = vpop.permute.xlu0 %510
        %v512 = vlaneseq
        %v513 = vshrl.u32 %v512, 7
        %v514 = vsub.s32 6, %v513
        %v515 = vrot.slane %v387, %v514
        %517 = vbcast.lane.b32.xlu0 %v515, 256
        %v518 = vpop.permute.xlu0 %517
        %s520 = sor.u32 256, 8
        %521 = vbcast.lane.b32.xlu0 %v515, %s520
        %v522 = vpop.permute.xlu0 %521
        %s524 = sor.u32 256, 16
        %525 = vbcast.lane.b32.xlu0 %v515, %s524
        %v526 = vpop.permute.xlu0 %525
        %s528 = sor.u32 256, 24
        %529 = vbcast.lane.b32.xlu0 %v515, %s528
        %v530 = vpop.permute.xlu0 %529
        %v531 = vlaneseq
        %v532 = vshrl.u32 %v531, 7
        %v533 = vsub.s32 7, %v532
        %v534 = vrot.slane %v387, %v533
        %536 = vbcast.lane.b32.xlu0 %v534, 256
        %v537 = vpop.permute.xlu0 %536
        %s539 = sor.u32 256, 8
        %540 = vbcast.lane.b32.xlu0 %v534, %s539
        %v541 = vpop.permute.xlu0 %540
        %s543 = sor.u32 256, 16
        %544 = vbcast.lane.b32.xlu0 %v534, %s543
        %v545 = vpop.permute.xlu0 %544
        %s547 = sor.u32 256, 24
        %548 = vbcast.lane.b32.xlu0 %v534, %s547
        %v549 = vpop.permute.xlu0 %548
        %v550 = vadd.f32 %v390, %v404
        %v551 = vadd.f32 %v391, %v408
        %v552 = vadd.f32 %v392, %v412
        %v553 = vadd.f32 %v393, %v416
        %v554 = vadd.f32 %v390, %v423
        %v555 = vadd.f32 %v391, %v427
        %v556 = vadd.f32 %v392, %v431
        %v557 = vadd.f32 %v393, %v435
        %v558 = vadd.f32 %v390, %v442
        %v559 = vadd.f32 %v391, %v446
        %v560 = vadd.f32 %v392, %v450
        %v561 = vadd.f32 %v393, %v454
        %v562 = vadd.f32 %v390, %v461
        %v563 = vadd.f32 %v391, %v465
        %v564 = vadd.f32 %v392, %v469
        %v565 = vadd.f32 %v393, %v473
        %v566 = vadd.f32 %v390, %v480
        %v567 = vadd.f32 %v391, %v484
        %v568 = vadd.f32 %v392, %v488
        %v569 = vadd.f32 %v393, %v492
        %v570 = vadd.f32 %v390, %v499
        %v571 = vadd.f32 %v391, %v503
        %v572 = vadd.f32 %v392, %v507
        %v573 = vadd.f32 %v393, %v511
        %v574 = vadd.f32 %v390, %v518
        %v575 = vadd.f32 %v391, %v522
        %v576 = vadd.f32 %v392, %v526
        %v577 = vadd.f32 %v393, %v530
        %v578 = vadd.f32 %v390, %v537
        %v579 = vadd.f32 %v391, %v541
        %v580 = vadd.f32 %v392, %v545
        %v581 = vadd.f32 %v393, %v549
        %v582 = vtanh.pop %v550
        %v583 = vtanh.pop %v551
        %v584 = vtanh.pop %v552
        %v585 = vtanh.pop %v553
        %v586 = vtanh.pop %v554
        %v587 = vtanh.pop %v555
        %v588 = vtanh.pop %v556
        %v589 = vtanh.pop %v557
        %v590 = vtanh.pop %v558
        %v591 = vtanh.pop %v559
        %v592 = vtanh.pop %v560
        %v593 = vtanh.pop %v561
        %v594 = vtanh.pop %v562
        %v595 = vtanh.pop %v563
        %v596 = vtanh.pop %v564
        %v597 = vtanh.pop %v565
        %v598 = vtanh.pop %v566
        %v599 = vtanh.pop %v567
        %v600 = vtanh.pop %v568
        %v601 = vtanh.pop %v569
        %v602 = vtanh.pop %v570
        %v603 = vtanh.pop %v571
        %v604 = vtanh.pop %v572
        %v605 = vtanh.pop %v573
        %v606 = vtanh.pop %v574
        %v607 = vtanh.pop %v575
        %v608 = vtanh.pop %v576
        %v609 = vtanh.pop %v577
        %v610 = vtanh.pop %v578
        %v611 = vtanh.pop %v579
        %v612 = vtanh.pop %v580
        %v613 = vtanh.pop %v581
        %615 = vset.pattern.permute.xlu0 0
        %616 = vperm.xlu0 %615, %v394
        %v617 = vpop.permute.xlu0 %616
        %620 = vset.pattern.permute.xlu0 0
        %621 = vperm.xlu0 %620, %v395
        %v622 = vpop.permute.xlu0 %621
        %625 = vset.pattern.permute.xlu0 0
        %626 = vperm.xlu0 %625, %v396
        %v627 = vpop.permute.xlu0 %626
        %630 = vset.pattern.permute.xlu0 0
        %631 = vperm.xlu0 %630, %v397
        %v632 = vpop.permute.xlu0 %631
        %v634 = vmul.f32 %v582, %v617
        %v635 = vmul.f32 %v583, %v622
        %v636 = vmul.f32 %v584, %v627
        %v637 = vmul.f32 %v585, %v632
        %v638 = vmul.f32 %v586, %v617
        %v639 = vmul.f32 %v587, %v622
        %v640 = vmul.f32 %v588, %v627
        %v641 = vmul.f32 %v589, %v632
        %v642 = vmul.f32 %v590, %v617
        %v643 = vmul.f32 %v591, %v622
        %v644 = vmul.f32 %v592, %v627
        %v645 = vmul.f32 %v593, %v632
        %v646 = vmul.f32 %v594, %v617
        %v647 = vmul.f32 %v595, %v622
        %v648 = vmul.f32 %v596, %v627
        %v649 = vmul.f32 %v597, %v632
        %v650 = vmul.f32 %v598, %v617
        %v651 = vmul.f32 %v599, %v622
        %v652 = vmul.f32 %v600, %v627
        %v653 = vmul.f32 %v601, %v632
        %v654 = vmul.f32 %v602, %v617
        %v655 = vmul.f32 %v603, %v622
        %v656 = vmul.f32 %v604, %v627
        %v657 = vmul.f32 %v605, %v632
        %v658 = vmul.f32 %v606, %v617
        %v659 = vmul.f32 %v607, %v622
        %v660 = vmul.f32 %v608, %v627
        %v661 = vmul.f32 %v609, %v632
        %v662 = vmul.f32 %v610, %v617
        %v663 = vmul.f32 %v611, %v622
        %v664 = vmul.f32 %v612, %v627
        %v665 = vmul.f32 %v613, %v632
        %v666 = vadd.f32 %v634, %v635
        %v667 = vadd.f32 %v666, %v636
        %v668 = vadd.f32 %v667, %v637
        %v669 = vrot.slane %v668, 4
        %v670 = vadd.f32 %v668, %v669
        %v671 = vrot.slane %v670, 2
        %v672 = vadd.f32 %v670, %v671
        %v673 = vrot.slane %v672, 1
        %v674 = vadd.f32 %v672, %v673
        %v675 = vadd.f32 %v638, %v639
        %v676 = vadd.f32 %v675, %v640
        %v677 = vadd.f32 %v676, %v641
        %v678 = vrot.slane %v677, 4
        %v679 = vadd.f32 %v677, %v678
        %v680 = vrot.slane %v679, 2
        %v681 = vadd.f32 %v679, %v680
        %v682 = vrot.slane %v681, 1
        %v683 = vadd.f32 %v681, %v682
        %v684 = vadd.f32 %v642, %v643
        %v685 = vadd.f32 %v684, %v644
        %v686 = vadd.f32 %v685, %v645
        %v687 = vrot.slane %v686, 4
        %v688 = vadd.f32 %v686, %v687
        %v689 = vrot.slane %v688, 2
        %v690 = vadd.f32 %v688, %v689
        %v691 = vrot.slane %v690, 1
        %v692 = vadd.f32 %v690, %v691
        %v693 = vadd.f32 %v646, %v647
        %v694 = vadd.f32 %v693, %v648
        %v695 = vadd.f32 %v694, %v649
        %v696 = vrot.slane %v695, 4
        %v697 = vadd.f32 %v695, %v696
        %v698 = vrot.slane %v697, 2
        %v699 = vadd.f32 %v697, %v698
        %v700 = vrot.slane %v699, 1
        %v701 = vadd.f32 %v699, %v700
        %v702 = vadd.f32 %v650, %v651
        %v703 = vadd.f32 %v702, %v652
        %v704 = vadd.f32 %v703, %v653
        %v705 = vrot.slane %v704, 4
        %v706 = vadd.f32 %v704, %v705
        %v707 = vrot.slane %v706, 2
        %v708 = vadd.f32 %v706, %v707
        %v709 = vrot.slane %v708, 1
        %v710 = vadd.f32 %v708, %v709
        %v711 = vadd.f32 %v654, %v655
        %v712 = vadd.f32 %v711, %v656
        %v713 = vadd.f32 %v712, %v657
        %v714 = vrot.slane %v713, 4
        %v715 = vadd.f32 %v713, %v714
        %v716 = vrot.slane %v715, 2
        %v717 = vadd.f32 %v715, %v716
        %v718 = vrot.slane %v717, 1
        %v719 = vadd.f32 %v717, %v718
        %v720 = vadd.f32 %v658, %v659
        %v721 = vadd.f32 %v720, %v660
        %v722 = vadd.f32 %v721, %v661
        %v723 = vrot.slane %v722, 4
        %v724 = vadd.f32 %v722, %v723
        %v725 = vrot.slane %v724, 2
        %v726 = vadd.f32 %v724, %v725
        %v727 = vrot.slane %v726, 1
        %v728 = vadd.f32 %v726, %v727
        %v729 = vadd.f32 %v662, %v663
        %v730 = vadd.f32 %v729, %v664
        %v731 = vadd.f32 %v730, %v665
        %v732 = vrot.slane %v731, 4
        %v733 = vadd.f32 %v731, %v732
        %v734 = vrot.slane %v733, 2
        %v735 = vadd.f32 %v733, %v734
        %v736 = vrot.slane %v735, 1
        %v737 = vadd.f32 %v735, %v736
        %v738 = vadd.f32 %v674, 0.0
        %v739 = vadd.f32 %v683, 0.0
        %v740 = vadd.f32 %v692, 0.0
        %v741 = vadd.f32 %v701, 0.0
        %v742 = vadd.f32 %v710, 0.0
        %v743 = vadd.f32 %v719, 0.0
        %v744 = vadd.f32 %v728, 0.0
        %v745 = vadd.f32 %v737, 0.0
        %v746 = vld [vmem:[%s310] sm:$0x1]
        %vm747 = vcmp.ne.s32.totalorder %v746, 0
        %v748 = vsel %vm747, 1, 0
        %v749 = vlaneseq
        %v750 = vshrl.u32 %v749, 7
        %v751 = vsub.s32 0, %v750
        %v752 = vrot.slane %v748, %v751
        %vm753 = vcmp.eq.s32.totalorder %v752, 1
        %vm762 = vcmask 1041409
        %v763 = vsel %vm762, %v739, %v738
        %vm764 = vcmask 1042434
        %v765 = vsel %vm764, %v740, %v763
        %vm766 = vcmask 1043459
        %v767 = vsel %vm766, %v741, %v765
        %vm768 = vcmask 1044484
        %v769 = vsel %vm768, %v742, %v767
        %vm770 = vcmask 1045509
        %v771 = vsel %vm770, %v743, %v769
        %vm772 = vcmask 1046534
        %v773 = vsel %vm772, %v744, %v771
        %vm774 = vcmask 1047559
        %v775 = vsel %vm774, %v745, %v773
        %v777 = vsel %vm753, -inf, %v775
        %778 = vmax.xlane.f32.xlu0 %v777
        %v779 = vpop.xlane.xlu0 %778
        %v780 = vsub.f32 %v777, %v779
        %v781 = vmul.f32 %v780, 1.442695
        %v782 = vpow.pop %v781
        %783 = vadd.xlane.f32.xlu0 %v782
        %v784 = vpop.xlane.xlu0 %783
        %v785 = vlog2.pop %v784
        %v786 = vmul.f32 %v785, 0.6931472
        %v787 = vsub.f32 %v780, %v786
        %788 = vst [vmem:[%s307] sm:$0xff] %v787
        %s789 = sand.u32 %s169, 1
        %s790 = scalar_lea.sflag [#allocation4], %s789
        %s791 = sand.u32 %s169, 1
        %s792 = smul.addr %s791, 8
        %s793 = scalar_lea.vmem [#allocation7], %s792
        // Predicated region
        $region49: #{tpu_custom_call.1} parent=39 // pred_check
          %p794 = pneg %p179
        $region50: #{tpu_custom_call.1} parent=39 // pred_check_branch
          %796 = sbr.rel (%p794) target = $region52
        $region51: #{tpu_custom_call.1} parent=39 // pred_region
          %s798 = ssub.s32 128, 128
          %799 = vsyncadd %s790, %s798
          %s800 = sadd.s32 %s30, %s29
          %s801 = smul.addr %s800, 128
          %s802 = scalar_lea.hbm %s5, %s801
          %s804 = sshll.u32 %s793, 4
          %s805 = int_to_ptr.vmem [resolvable:$true] %s804
          %807 = dma.vmem_to_hbm [thread:$0]  %s805, 128, %s802, %s790
        $region52: #{tpu_custom_call.1} parent=39 // pred_fallthru
          _
      $region40: #{tpu_custom_call.1} parent=5 // pred_fallthru
        _
      %p808 = scmp.le.s32.totalorder 2, %s20
      // Predicated region
      $region53: #{tpu_custom_call.1} parent=5 // pred_check
        %p809 = pneg %p808
      $region54: #{tpu_custom_call.1} parent=5 // pred_check_branch
        %811 = sbr.rel (%p809) target = $region56
      $region55: #{tpu_custom_call.1} parent=5 // pred_region
        %s812 = ssub.s32 %s20, 2
        // Predicated region
        $region57: #{tpu_custom_call.1} parent=55 // pred_check
          %p813 = pneg %p185
        $region58: #{tpu_custom_call.1} parent=55 // pred_check_branch
          %815 = sbr.rel (%p813) target = $region60
        $region59: #{tpu_custom_call.1} parent=55 // pred_region
          %s816 = sand.u32 %s170, 1
          %s817 = scalar_lea.sflag [#allocation4], %s816
          %s818 = sand.u32 %s170, 1
          %s819 = smul.addr %s818, 8
          %s820 = scalar_lea.vmem [#allocation7], %s819
          %821 = dma.done %s817, 128
        $region60: #{tpu_custom_call.1} parent=55 // pred_fallthru
          _
      $region56: #{tpu_custom_call.1} parent=5 // pred_fallthru
        _
    $region6: #{tpu_custom_call.1} parent=1 // loop_footer
      %s24 = sadd.s32 1, %s20
    $region7: #{tpu_custom_call.1} parent=1 // loop_footer_branch
      %19 = sbr.rel target = $region3
    $region8: #{tpu_custom_call.1} parent=1 // loop_exit
      _
    %822 = vsyncpa [#allocation3], 1
    %s823 = scalar_lea.sflag [#allocation3], 1
    %824 = vsyncpa %s823, 1
    %825 = vsyncpa [#allocation6], 1
    %s826 = scalar_lea.sflag [#allocation6], 1
    %827 = vsyncpa %s826, 1
    %828 = vsyncpa [#allocation4], 1
    %s829 = scalar_lea.sflag [#allocation4], 1
    %830 = vsyncpa %s829, 1

</llo_original>
